<compile_context>
chip_gen: v7x
topology: tpu7x:2x2x1
jax: 0.10.0
libtpu: 0.0.40
codegen_flags: <defaults>
</compile_context>

<pallas_src>
import math
import functools

import jax
import jax.numpy as jnp
from jax.experimental import pallas as pl
from jax.experimental.pallas import tpu as pltpu

HIDDEN = 128     # hidden width of the DQN MLP (matches nn.Linear(_, 128))
LANE = 128       # TPU lane width
SUBLANE = 8      # TPU sublane width


def _round_up(n, m):
    return ((n + m - 1) // m) * m


def dqn_mlp_kernel(x_ref, w1_ref, b1_ref, w2_ref, b2_ref, w3_ref, b3_ref, o_ref):
    """One batch tile of: fc1 -> ReLU -> fc2 -> ReLU -> fc3.

    x arrives in f32 and is cast to bf16 on-chip; all matmuls run bf16 x bf16
    on the MXU with f32 accumulation. Bias adds and ReLUs stay f32 on the VPU.
    The output tile is lane-dense (128-column multiple) -> unmasked stores.
    """
    x = x_ref[...].astype(jnp.bfloat16)                              # (tb, in_dim)
    h1 = jnp.dot(x, w1_ref[...], preferred_element_type=jnp.float32) + b1_ref[...]
    h1 = jnp.maximum(h1, 0.0)
    h2 = jnp.dot(h1.astype(jnp.bfloat16), w2_ref[...],
                 preferred_element_type=jnp.float32) + b2_ref[...]
    h2 = jnp.maximum(h2, 0.0)
    o_ref[...] = jnp.dot(h2.astype(jnp.bfloat16), w3_ref[...],
                         preferred_element_type=jnp.float32) + b3_ref[...]


@functools.partial(jax.jit, static_argnames=("block_b",))
def dqn_forward(x, params, block_b=512):
    """x: (B, input_dim) f32. params: dict of w1,b1,w2,b2,w3,b3 (f32, x @ W layout)."""
    w1, b1 = params["w1"], params["b1"]
    w2, b2 = params["w2"], params["b2"]
    w3, b3 = params["w3"], params["b3"]

    B, in_dim = x.shape
    out_dim = w3.shape[1]
    out_pad = _round_up(out_dim, LANE)

    # Batch tile: multiple of the sublane width; Pallas masks the partial last tile.
    tile_b = min(_round_up(block_b, SUBLANE), _round_up(B, SUBLANE))
    grid = (pl.cdiv(B, tile_b),)

    # One-time (tiny) weight plumbing: bf16 MXU operands; fc3 padded lane-dense.
    w1_b = w1.astype(jnp.bfloat16)                                    # (in_dim, 128)
    w2_b = w2.astype(jnp.bfloat16)                                    # (128, 128)
    w3_b = jnp.zeros((HIDDEN, out_pad), jnp.bfloat16).at[:, :out_dim].set(
        w3.astype(jnp.bfloat16))
    b1_r = b1.reshape(1, HIDDEN).astype(jnp.float32)
    b2_r = b2.reshape(1, HIDDEN).astype(jnp.float32)
    b3_r = jnp.zeros((1, out_pad), jnp.float32).at[:, :out_dim].set(
        b3.reshape(1, out_dim).astype(jnp.float32))

    const = lambda i: (0, 0)  # weights/biases: same block every step -> VMEM-resident
    in_specs = [
        pl.BlockSpec((tile_b, in_dim), lambda i: (i, 0)),   # x: streamed per batch tile
        pl.BlockSpec((in_dim, HIDDEN), const),              # w1
        pl.BlockSpec((1, HIDDEN), const),                   # b1
        pl.BlockSpec((HIDDEN, HIDDEN), const),              # w2
        pl.BlockSpec((1, HIDDEN), const),                   # b2
        pl.BlockSpec((HIDDEN, out_pad), const),             # w3
        pl.BlockSpec((1, out_pad), const),                  # b3
    ]
    out_spec = pl.BlockSpec((tile_b, out_pad), lambda i: (i, 0))

    flops = 2 * B * (in_dim * HIDDEN + HIDDEN * HIDDEN + HIDDEN * out_pad)
    bytes_accessed = (
        x.size * x.dtype.itemsize
        + (w1_b.size + w2_b.size + w3_b.size) * 2
        + (b1_r.size + b2_r.size + b3_r.size) * 4
        + B * out_pad * 4
    )

    out_full = pl.pallas_call(
        dqn_mlp_kernel,
        out_shape=jax.ShapeDtypeStruct((B, out_pad), jnp.float32),
        grid=grid,
        in_specs=in_specs,
        out_specs=out_spec,
        compiler_params=pltpu.CompilerParams(
            dimension_semantics=("parallel",),       # shards batch tiles across v7x's 2 TCs
            vmem_limit_bytes=32 * 1024 * 1024,       # comfortable on v7x's 64 MiB VMEM
        ),
        cost_estimate=pl.CostEstimate(
            flops=flops, transcendentals=0, bytes_accessed=bytes_accessed),
    )(x, w1_b, b1_r, w2_b, b2_r, w3_b, b3_r)

    return out_full[:, :out_dim]


def init_params(key, input_dim, output_dim, hidden=HIDDEN):
    """Deterministic init mimicking nn.Linear default (uniform(-1/sqrt(fan_in), ...))."""
    ks = jax.random.split(key, 6)

    def lin(kw, kb, fan_in, fan_out):
        bound = 1.0 / math.sqrt(fan_in)
        w = jax.random.uniform(kw, (fan_in, fan_out), jnp.float32, -bound, bound)
        b = jax.random.uniform(kb, (1, fan_out), jnp.float32, -bound, bound)
        return w, b

    w1, b1 = lin(ks[0], ks[1], input_dim, hidden)
    w2, b2 = lin(ks[2], ks[3], hidden, hidden)
    w3, b3 = lin(ks[4], ks[5], hidden, output_dim)
    return dict(w1=w1, b1=b1, w2=w2, b2=b2, w3=w3, b3=b3)


def reference_forward(x, p):
    """Pure-JAX reference emulating the kernel's bf16-operand / f32-accumulate path."""
    w1 = p["w1"].astype(jnp.bfloat16)
    w2 = p["w2"].astype(jnp.bfloat16)
    w3 = p["w3"].astype(jnp.bfloat16)
    h1 = jnp.dot(x.astype(jnp.bfloat16), w1, preferred_element_type=jnp.float32) + p["b1"]
    h1 = jnp.maximum(h1, 0.0)
    h2 = jnp.dot(h1.astype(jnp.bfloat16), w2, preferred_element_type=jnp.float32) + p["b2"]
    h2 = jnp.maximum(h2, 0.0)
    return jnp.dot(h2.astype(jnp.bfloat16), w3, preferred_element_type=jnp.float32) + p["b3"]


if __name__ == "__main__":
    key = jax.random.PRNGKey(0)
    k_x, k_p, k_x2 = jax.random.split(key, 3)

    batch, input_dim, output_dim = 4, 32, 8
    x = jax.random.normal(k_x, (batch, input_dim), dtype=jnp.float32)
    params = init_params(k_p, input_dim, output_dim)

    # Small-batch path (single, partially-masked tile).
    out = jax.block_until_ready(dqn_forward(x, params))
    ref = reference_forward(x, params)
    assert out.shape == (batch, output_dim)
    assert jnp.allclose(out, ref, atol=2e-2, rtol=2e-2), "mismatch vs reference (small batch)"

    # Multi-tile path: exercises the batch grid, a partial last tile and resident weights.
    batch2 = 300
    x2 = jax.random.normal(k_x2, (batch2, input_dim), dtype=jnp.float32)
    out2 = jax.block_until_ready(dqn_forward(x2, params, block_b=128))
    ref2 = reference_forward(x2, params)
    assert out2.shape == (batch2, output_dim)
    assert jnp.allclose(out2, ref2, atol=2e-2, rtol=2e-2), "mismatch vs reference (tiled batch)"

    print("KERNEL_OK")
</pallas_src>

<mosaic_0001>
module attributes {stable_mosaic.version = 11 : i64} {
  func.func @dqn_mlp_kernel(%arg0: i32, %arg1: memref<8x32xf32, #tpu.memory_space<vmem>>, %arg2: memref<32x128xbf16, #tpu.memory_space<vmem>>, %arg3: memref<1x128xf32, #tpu.memory_space<vmem>>, %arg4: memref<128x128xbf16, #tpu.memory_space<vmem>>, %arg5: memref<1x128xf32, #tpu.memory_space<vmem>>, %arg6: memref<128x128xbf16, #tpu.memory_space<vmem>>, %arg7: memref<1x128xf32, #tpu.memory_space<vmem>>, %arg8: memref<8x128xf32, #tpu.memory_space<vmem>>) attributes {dimension_semantics = [#tpu.dimension_semantics<parallel>], iteration_bounds = array<i64: 1>, scalar_prefetch = 0 : i64, scratch_operands = 0 : i64, tpu.core_type = #tpu.core_type<tc>, window_params = [{transform_indices = @transform_0, window_bounds = array<i64: 8, 32>}, {pipeline_mode = #tpu.pipeline_mode<synchronous>, transform_indices = @transform_1, window_bounds = array<i64: 32, 128>}, {pipeline_mode = #tpu.pipeline_mode<synchronous>, transform_indices = @transform_2, window_bounds = array<i64: 1, 128>}, {pipeline_mode = #tpu.pipeline_mode<synchronous>, transform_indices = @transform_3, window_bounds = array<i64: 128, 128>}, {pipeline_mode = #tpu.pipeline_mode<synchronous>, transform_indices = @transform_4, window_bounds = array<i64: 1, 128>}, {pipeline_mode = #tpu.pipeline_mode<synchronous>, transform_indices = @transform_5, window_bounds = array<i64: 128, 128>}, {pipeline_mode = #tpu.pipeline_mode<synchronous>, transform_indices = @transform_6, window_bounds = array<i64: 1, 128>}, {transform_indices = @transform_7, window_bounds = array<i64: 8, 128>}]} {
    %c0 = arith.constant 0 : index
    %c0_0 = arith.constant 0 : index
    %0 = vector.load %arg1[%c0, %c0_0] : memref<8x32xf32, #tpu.memory_space<vmem>>, vector<8x32xf32>
    %1 = arith.truncf %0 : vector<8x32xf32> to vector<8x32xbf16>
    %c0_1 = arith.constant 0 : index
    %c0_2 = arith.constant 0 : index
    %2 = vector.load %arg2[%c0_1, %c0_2] : memref<32x128xbf16, #tpu.memory_space<vmem>>, vector<32x128xbf16>
    %cst = arith.constant dense<0.000000e+00> : vector<8x128xf32>
    %3 = tpu.matmul %1, %2, %cst {dimension_numbers = #tpu.dot_dimension_numbers<[1], [0], [0], [1], [0, 0, 1, 1], [], []>} : vector<8x32xbf16>, vector<32x128xbf16>, vector<8x128xf32> -> vector<8x128xf32>
    %c0_3 = arith.constant 0 : index
    %c0_4 = arith.constant 0 : index
    %4 = vector.load %arg3[%c0_3, %c0_4] : memref<1x128xf32, #tpu.memory_space<vmem>>, vector<1x128xf32>
    %5 = vector.broadcast %4 : vector<1x128xf32> to vector<8x128xf32>
    %6 = arith.addf %3, %5 : vector<8x128xf32>
    %cst_5 = arith.constant 0.000000e+00 : f32
    %7 = vector.broadcast %cst_5 : f32 to vector<8x128xf32>
    %8 = arith.maximumf %6, %7 : vector<8x128xf32>
    %9 = arith.truncf %8 : vector<8x128xf32> to vector<8x128xbf16>
    %c0_6 = arith.constant 0 : index
    %c0_7 = arith.constant 0 : index
    %10 = vector.load %arg4[%c0_6, %c0_7] : memref<128x128xbf16, #tpu.memory_space<vmem>>, vector<128x128xbf16>
    %cst_8 = arith.constant dense<0.000000e+00> : vector<8x128xf32>
    %11 = tpu.matmul %9, %10, %cst_8 {dimension_numbers = #tpu.dot_dimension_numbers<[1], [0], [0], [1], [0, 0, 1, 1], [], []>} : vector<8x128xbf16>, vector<128x128xbf16>, vector<8x128xf32> -> vector<8x128xf32>
    %c0_9 = arith.constant 0 : index
    %c0_10 = arith.constant 0 : index
    %12 = vector.load %arg5[%c0_9, %c0_10] : memref<1x128xf32, #tpu.memory_space<vmem>>, vector<1x128xf32>
    %13 = vector.broadcast %12 : vector<1x128xf32> to vector<8x128xf32>
    %14 = arith.addf %11, %13 : vector<8x128xf32>
    %cst_11 = arith.constant 0.000000e+00 : f32
    %15 = vector.broadcast %cst_11 : f32 to vector<8x128xf32>
    %16 = arith.maximumf %14, %15 : vector<8x128xf32>
    %17 = arith.truncf %16 : vector<8x128xf32> to vector<8x128xbf16>
    %c0_12 = arith.constant 0 : index
    %c0_13 = arith.constant 0 : index
    %18 = vector.load %arg6[%c0_12, %c0_13] : memref<128x128xbf16, #tpu.memory_space<vmem>>, vector<128x128xbf16>
    %cst_14 = arith.constant dense<0.000000e+00> : vector<8x128xf32>
    %19 = tpu.matmul %17, %18, %cst_14 {dimension_numbers = #tpu.dot_dimension_numbers<[1], [0], [0], [1], [0, 0, 1, 1], [], []>} : vector<8x128xbf16>, vector<128x128xbf16>, vector<8x128xf32> -> vector<8x128xf32>
    %c0_15 = arith.constant 0 : index
    %c0_16 = arith.constant 0 : index
    %20 = vector.load %arg7[%c0_15, %c0_16] : memref<1x128xf32, #tpu.memory_space<vmem>>, vector<1x128xf32>
    %21 = vector.broadcast %20 : vector<1x128xf32> to vector<8x128xf32>
    %22 = arith.addf %19, %21 : vector<8x128xf32>
    %c0_17 = arith.constant 0 : index
    %c0_18 = arith.constant 0 : index
    %23 = vector.load %arg8[%c0_17, %c0_18] : memref<8x128xf32, #tpu.memory_space<vmem>>, vector<8x128xf32>
    tpu.vector_store %arg8[%c0_17, %c0_18], %22 {strides = array<i32>} : memref<8x128xf32, #tpu.memory_space<vmem>>, vector<8x128xf32>,
    return
  }
  func.func @transform_0(%arg0: i32) -> (i32, i32) {
    %c0_i32 = arith.constant 0 : i32
    %c0_i32_0 = arith.constant 0 : i32
    return %arg0, %c0_i32 : i32, i32
  }
  func.func @transform_1(%arg0: i32) -> (i32, i32) {
    %c0_i32 = arith.constant 0 : i32
    %c0_i32_0 = arith.constant 0 : i32
    %c0_i32_1 = arith.constant 0 : i32
    return %c0_i32, %c0_i32_0 : i32, i32
  }
  func.func @transform_2(%arg0: i32) -> (i32, i32) {
    %c0_i32 = arith.constant 0 : i32
    %c0_i32_0 = arith.constant 0 : i32
    %c0_i32_1 = arith.constant 0 : i32
    return %c0_i32, %c0_i32_0 : i32, i32
  }
  func.func @transform_3(%arg0: i32) -> (i32, i32) {
    %c0_i32 = arith.constant 0 : i32
    %c0_i32_0 = arith.constant 0 : i32
    %c0_i32_1 = arith.constant 0 : i32
    return %c0_i32, %c0_i32_0 : i32, i32
  }
  func.func @transform_4(%arg0: i32) -> (i32, i32) {
    %c0_i32 = arith.constant 0 : i32
    %c0_i32_0 = arith.constant 0 : i32
    %c0_i32_1 = arith.constant 0 : i32
    return %c0_i32, %c0_i32_0 : i32, i32
  }
  func.func @transform_5(%arg0: i32) -> (i32, i32) {
    %c0_i32 = arith.constant 0 : i32
    %c0_i32_0 = arith.constant 0 : i32
    %c0_i32_1 = arith.constant 0 : i32
    return %c0_i32, %c0_i32_0 : i32, i32
  }
  func.func @transform_6(%arg0: i32) -> (i32, i32) {
    %c0_i32 = arith.constant 0 : i32
    %c0_i32_0 = arith.constant 0 : i32
    %c0_i32_1 = arith.constant 0 : i32
    return %c0_i32, %c0_i32_0 : i32, i32
  }
  func.func @transform_7(%arg0: i32) -> (i32, i32) {
    %c0_i32 = arith.constant 0 : i32
    %c0_i32_0 = arith.constant 0 : i32
    return %arg0, %c0_i32 : i32, i32
  }
}

</mosaic_0001>

<llo_original>
// kernel: dqn_forward.1
$region0: #{dqn_forward.1}
  #allocation0 [shape = 'u32[]', space=smem, size = 0x4, offset = 0x4, fixed_abs, tag = 'smem constant byte address 0x4 - core index']
  #allocation1 [shape = 'u32[144,128]{1,0:T(1,128)}', space=vmem, size = 0x12000, scoped, tag = 'internal scratch']
  %s0 = inlined_call_operand.vmem [shape: f32[4,32], index: 0, kind: input, shape index: {}]
  %s1 = inlined_call_operand.vmem [shape: bf16[32,128], index: 1, kind: input, shape index: {}]
  %s2 = inlined_call_operand.vmem [shape: f32[1,128], index: 2, kind: input, shape index: {}]
  %s3 = inlined_call_operand.vmem [shape: bf16[128,128], index: 3, kind: input, shape index: {}]
  %s4 = inlined_call_operand.vmem [shape: f32[1,128], index: 4, kind: input, shape index: {}]
  %s5 = inlined_call_operand.vmem [shape: bf16[128,128], index: 5, kind: input, shape index: {}]
  %s6 = inlined_call_operand.vmem [shape: f32[1,128], index: 6, kind: input, shape index: {}]
  %s7 = inlined_call_operand.hbm [shape: f32[4,128], index: 7, kind: output, shape index: {}]
  %s8 = sld [smem:[#allocation0]]
  $region38: #{dqn_forward.1} parent=0
    _
  %s10 = ssub.s32 1, %s8
  %s11 = scalar_select 0, %s10, %s8
  $region1: #{dqn_forward.1} parent=0
    #allocation2 [shape = 'u8[4096]{0}', space=vmem, size = 0x1000, scoped, tag = 'output window, operand 0, single buffered']
    #allocation3 [shape = 's32[1]{0}', space=sflag, size = 0x4, scoped, tag = 'scoped memory for dqn_forward.1']
    %12 = vsyncpa [#allocation3], 0
    // Predicated region
    $region2: #{dqn_forward.1} parent=1 // pred_check
      _
    $region3: #{dqn_forward.1} parent=1 // pred_check_branch
      %14 = sbr.rel (0) target = $region5
    $region4: #{dqn_forward.1} parent=1 // pred_region
      _
    $region5: #{dqn_forward.1} parent=1 // pred_fallthru
      _
    // Predicated region
    $region6: #{dqn_forward.1} parent=1 // pred_check
      _
    $region7: #{dqn_forward.1} parent=1 // pred_check_branch
      %16 = sbr.rel (0) target = $region9
    $region8: #{dqn_forward.1} parent=1 // pred_region
      _
    $region9: #{dqn_forward.1} parent=1 // pred_fallthru
      _
    // Predicated region
    $region10: #{dqn_forward.1} parent=1 // pred_check
      _
    $region11: #{dqn_forward.1} parent=1 // pred_check_branch
      %18 = sbr.rel (0) target = $region13
    $region12: #{dqn_forward.1} parent=1 // pred_region
      _
    $region13: #{dqn_forward.1} parent=1 // pred_fallthru
      _
    // Predicated region
    $region14: #{dqn_forward.1} parent=1 // pred_check
      _
    $region15: #{dqn_forward.1} parent=1 // pred_check_branch
      %20 = sbr.rel (0) target = $region17
    $region16: #{dqn_forward.1} parent=1 // pred_region
      _
    $region17: #{dqn_forward.1} parent=1 // pred_fallthru
      _
    // Predicated region
    $region18: #{dqn_forward.1} parent=1 // pred_check
      _
    $region19: #{dqn_forward.1} parent=1 // pred_check_branch
      %22 = sbr.rel (0) target = $region21
    $region20: #{dqn_forward.1} parent=1 // pred_region
      _
    $region21: #{dqn_forward.1} parent=1 // pred_fallthru
      _
    // Predicated region
    $region22: #{dqn_forward.1} parent=1 // pred_check
      _
    $region23: #{dqn_forward.1} parent=1 // pred_check_branch
      %24 = sbr.rel (0) target = $region25
    $region24: #{dqn_forward.1} parent=1 // pred_region
      _
    $region25: #{dqn_forward.1} parent=1 // pred_fallthru
      _
    // Predicated region
    $region26: #{dqn_forward.1} parent=1 // pred_check
      _
    $region27: #{dqn_forward.1} parent=1 // pred_check_branch
      %26 = sbr.rel (0) target = $region29
    $region28: #{dqn_forward.1} parent=1 // pred_region
      _
    $region29: #{dqn_forward.1} parent=1 // pred_fallthru
      _
    %v28 = vld [vmem:[%s0] sm:$0xff]
    %v29 = vpack.c.bf16 %v28, %v28
    %v30 = vld [vmem:[%s1] sm:$0xf]
    %v31 = vld [vmem:[%s1 + $0x4] sm:$0xf]
    %v32 = vld [vmem:[%s1 + $0x8] sm:$0xf]
    %v33 = vld [vmem:[%s1 + $0xc] sm:$0xf]
    %v34 = vld [vmem:[%s2] sm:$0x1]
    %v36 = vlaneseq
    %v37 = vshrl.u32 %v36, 7
    %v38 = vsub.s32 0, %v37
    %v39 = vrot.slane %v34, %v38
    %v45 = vunpack.c.l.b16 %v30
    %v46 = vunpack.c.l.b16 %v31
    %v47 = vunpack.c.l.b16 %v32
    %v48 = vunpack.c.l.b16 %v33
    %v49 = vpack.c.b16 %v46, %v45
    %v50 = vpack.c.b16 %v48, %v47
    %vm53 = vcmask 261120
    %v55 = vsel %vm53, %v29, 0
    %57 = vmatprep.subr.bf16.mxu0 0
    %58 = vmatpush1.bf16.msra.mxu0 %v49
    %59 = vmatprep.subr.bf16.mxu0 0
    %60 = vmatpush1.bf16.msra.mxu0 %v50
    %61 = vmatprep.subr.bf16.mxu0 0
    %62 = vmatpush1.bf16.msra.mxu0 0
    %63 = vmatprep.subr.bf16.mxu0 0
    %64 = vmatpush1.bf16.msra.mxu0 0
    %65 = vmatprep.subr.bf16.mxu0 0
    %66 = vmatpush1.bf16.msra.mxu0 0
    %67 = vmatprep.subr.bf16.mxu0 0
    %68 = vmatpush1.bf16.msra.mxu0 0
    %69 = vmatprep.subr.bf16.mxu0 0
    %70 = vmatpush1.bf16.msra.mxu0 0
    %71 = vmatprep.subr.bf16.mxu0 0
    %72 = vmatpush1.bf16.msra.mxu0 0
    %73 = vmatprep.subr.bf16.mxu0 0
    %74 = vmatpush1.bf16.msra.mxu0 0
    %75 = vmatprep.subr.bf16.mxu0 0
    %76 = vmatpush1.bf16.msra.mxu0 0
    %77 = vmatprep.subr.bf16.mxu0 0
    %78 = vmatpush1.bf16.msra.mxu0 0
    %79 = vmatprep.subr.bf16.mxu0 0
    %80 = vmatpush1.bf16.msra.mxu0 0
    %81 = vmatprep.subr.bf16.mxu0 0
    %82 = vmatpush1.bf16.msra.mxu0 0
    %83 = vmatprep.subr.bf16.mxu0 0
    %84 = vmatpush1.bf16.msra.mxu0 0
    %85 = vmatprep.subr.bf16.mxu0 0
    %86 = vmatpush1.bf16.msra.mxu0 0
    %87 = vmatprep.subr.bf16.mxu0 0
    %88 = vmatpush1.bf16.msra.mxu0 0
    %89 = vmatprep.mubr.bf16.mxu0 0
    %90 = vmatmul.mubr.bf16.gmra.mrb[0].mxu0 %v55
    %v91 = vpop.f32.mrb[0].mxu0
    %v92 = vadd.f32 %v39, %v91
    %v93 = vpop.f32.mrb[0].mxu0
    %v94 = vpop.f32.mrb[0].mxu0
    %v95 = vpop.f32.mrb[0].mxu0
    %96 = vdwg.mxu0
    %v97 = vmax.f32 %v92, 0.0
    %v98 = vpack.c.bf16 %v97, %v97
    %v99 = vld [vmem:[%s3] sm:$0xf]
    %v100 = vld [vmem:[%s3 + $0x4] sm:$0xf]
    %v101 = vld [vmem:[%s3 + $0x8] sm:$0xf]
    %v102 = vld [vmem:[%s3 + $0xc] sm:$0xf]
    %v103 = vld [vmem:[%s3 + $0x10] sm:$0xf]
    %v104 = vld [vmem:[%s3 + $0x14] sm:$0xf]
    %v105 = vld [vmem:[%s3 + $0x18] sm:$0xf]
    %v106 = vld [vmem:[%s3 + $0x1c] sm:$0xf]
    %v107 = vld [vmem:[%s3 + $0x20] sm:$0xf]
    %v108 = vld [vmem:[%s3 + $0x24] sm:$0xf]
    %v109 = vld [vmem:[%s3 + $0x28] sm:$0xf]
    %v110 = vld [vmem:[%s3 + $0x2c] sm:$0xf]
    %v111 = vld [vmem:[%s3 + $0x30] sm:$0xf]
    %v112 = vld [vmem:[%s3 + $0x34] sm:$0xf]
    %v113 = vld [vmem:[%s3 + $0x38] sm:$0xf]
    %v114 = vld [vmem:[%s3 + $0x3c] sm:$0xf]
    %v115 = vld [vmem:[%s4] sm:$0x1]
    %v117 = vlaneseq
    %v118 = vshrl.u32 %v117, 7
    %v119 = vsub.s32 0, %v118
    %v120 = vrot.slane %v115, %v119
    %v138 = vunpack.c.l.b16 %v99
    %v139 = vunpack.c.l.b16 %v100
    %v140 = vunpack.c.l.b16 %v101
    %v141 = vunpack.c.l.b16 %v102
    %v142 = vunpack.c.l.b16 %v103
    %v143 = vunpack.c.l.b16 %v104
    %v144 = vunpack.c.l.b16 %v105
    %v145 = vunpack.c.l.b16 %v106
    %v146 = vunpack.c.l.b16 %v107
    %v147 = vunpack.c.l.b16 %v108
    %v148 = vunpack.c.l.b16 %v109
    %v149 = vunpack.c.l.b16 %v110
    %v150 = vunpack.c.l.b16 %v111
    %v151 = vunpack.c.l.b16 %v112
    %v152 = vunpack.c.l.b16 %v113
    %v153 = vunpack.c.l.b16 %v114
    %v154 = vpack.c.b16 %v139, %v138
    %v155 = vpack.c.b16 %v141, %v140
    %v156 = vpack.c.b16 %v143, %v142
    %v157 = vpack.c.b16 %v145, %v144
    %v158 = vpack.c.b16 %v147, %v146
    %v159 = vpack.c.b16 %v149, %v148
    %v160 = vpack.c.b16 %v151, %v150
    %v161 = vpack.c.b16 %v153, %v152
    %170 = vmatprep.subr.bf16.mxu0 0
    %171 = vmatpush1.bf16.msra.mxu0 %v154
    %172 = vmatprep.subr.bf16.mxu0 0
    %173 = vmatpush1.bf16.msra.mxu0 %v155
    %174 = vmatprep.subr.bf16.mxu0 0
    %175 = vmatpush1.bf16.msra.mxu0 %v156
    %176 = vmatprep.subr.bf16.mxu0 0
    %177 = vmatpush1.bf16.msra.mxu0 %v157
    %178 = vmatprep.subr.bf16.mxu0 0
    %179 = vmatpush1.bf16.msra.mxu0 %v158
    %180 = vmatprep.subr.bf16.mxu0 0
    %181 = vmatpush1.bf16.msra.mxu0 %v159
    %182 = vmatprep.subr.bf16.mxu0 0
    %183 = vmatpush1.bf16.msra.mxu0 %v160
    %184 = vmatprep.subr.bf16.mxu0 0
    %185 = vmatpush1.bf16.msra.mxu0 %v161
    %186 = vmatprep.subr.bf16.mxu0 0
    %187 = vmatpush1.bf16.msra.mxu0 0
    %188 = vmatprep.subr.bf16.mxu0 0
    %189 = vmatpush1.bf16.msra.mxu0 0
    %190 = vmatprep.subr.bf16.mxu0 0
    %191 = vmatpush1.bf16.msra.mxu0 0
    %192 = vmatprep.subr.bf16.mxu0 0
    %193 = vmatpush1.bf16.msra.mxu0 0
    %194 = vmatprep.subr.bf16.mxu0 0
    %195 = vmatpush1.bf16.msra.mxu0 0
    %196 = vmatprep.subr.bf16.mxu0 0
    %197 = vmatpush1.bf16.msra.mxu0 0
    %198 = vmatprep.subr.bf16.mxu0 0
    %199 = vmatpush1.bf16.msra.mxu0 0
    %200 = vmatprep.subr.bf16.mxu0 0
    %201 = vmatpush1.bf16.msra.mxu0 0
    %202 = vmatprep.mubr.bf16.mxu0 0
    %203 = vmatmul.mubr.bf16.gmra.mrb[0].mxu0 %v98
    %v204 = vpop.f32.mrb[0].mxu0
    %v205 = vadd.f32 %v120, %v204
    %v206 = vpop.f32.mrb[0].mxu0
    %v207 = vpop.f32.mrb[0].mxu0
    %v208 = vpop.f32.mrb[0].mxu0
    %209 = vdwg.mxu0
    %v210 = vmax.f32 %v205, 0.0
    %v211 = vpack.c.bf16 %v210, %v210
    %v212 = vld [vmem:[%s5] sm:$0xf]
    %v213 = vld [vmem:[%s5 + $0x4] sm:$0xf]
    %v214 = vld [vmem:[%s5 + $0x8] sm:$0xf]
    %v215 = vld [vmem:[%s5 + $0xc] sm:$0xf]
    %v216 = vld [vmem:[%s5 + $0x10] sm:$0xf]
    %v217 = vld [vmem:[%s5 + $0x14] sm:$0xf]
    %v218 = vld [vmem:[%s5 + $0x18] sm:$0xf]
    %v219 = vld [vmem:[%s5 + $0x1c] sm:$0xf]
    %v220 = vld [vmem:[%s5 + $0x20] sm:$0xf]
    %v221 = vld [vmem:[%s5 + $0x24] sm:$0xf]
    %v222 = vld [vmem:[%s5 + $0x28] sm:$0xf]
    %v223 = vld [vmem:[%s5 + $0x2c] sm:$0xf]
    %v224 = vld [vmem:[%s5 + $0x30] sm:$0xf]
    %v225 = vld [vmem:[%s5 + $0x34] sm:$0xf]
    %v226 = vld [vmem:[%s5 + $0x38] sm:$0xf]
    %v227 = vld [vmem:[%s5 + $0x3c] sm:$0xf]
    %v228 = vld [vmem:[%s6] sm:$0x1]
    %v230 = vlaneseq
    %v231 = vshrl.u32 %v230, 7
    %v232 = vsub.s32 0, %v231
    %v233 = vrot.slane %v228, %v232
    %v251 = vunpack.c.l.b16 %v212
    %v252 = vunpack.c.l.b16 %v213
    %v253 = vunpack.c.l.b16 %v214
    %v254 = vunpack.c.l.b16 %v215
    %v255 = vunpack.c.l.b16 %v216
    %v256 = vunpack.c.l.b16 %v217
    %v257 = vunpack.c.l.b16 %v218
    %v258 = vunpack.c.l.b16 %v219
    %v259 = vunpack.c.l.b16 %v220
    %v260 = vunpack.c.l.b16 %v221
    %v261 = vunpack.c.l.b16 %v222
    %v262 = vunpack.c.l.b16 %v223
    %v263 = vunpack.c.l.b16 %v224
    %v264 = vunpack.c.l.b16 %v225
    %v265 = vunpack.c.l.b16 %v226
    %v266 = vunpack.c.l.b16 %v227
    %v267 = vpack.c.b16 %v252, %v251
    %v268 = vpack.c.b16 %v254, %v253
    %v269 = vpack.c.b16 %v256, %v255
    %v270 = vpack.c.b16 %v258, %v257
    %v271 = vpack.c.b16 %v260, %v259
    %v272 = vpack.c.b16 %v262, %v261
    %v273 = vpack.c.b16 %v264, %v263
    %v274 = vpack.c.b16 %v266, %v265
    %283 = vmatprep.subr.bf16.mxu0 0
    %284 = vmatpush1.bf16.msra.mxu0 %v267
    %285 = vmatprep.subr.bf16.mxu0 0
    %286 = vmatpush1.bf16.msra.mxu0 %v268
    %287 = vmatprep.subr.bf16.mxu0 0
    %288 = vmatpush1.bf16.msra.mxu0 %v269
    %289 = vmatprep.subr.bf16.mxu0 0
    %290 = vmatpush1.bf16.msra.mxu0 %v270
    %291 = vmatprep.subr.bf16.mxu0 0
    %292 = vmatpush1.bf16.msra.mxu0 %v271
    %293 = vmatprep.subr.bf16.mxu0 0
    %294 = vmatpush1.bf16.msra.mxu0 %v272
    %295 = vmatprep.subr.bf16.mxu0 0
    %296 = vmatpush1.bf16.msra.mxu0 %v273
    %297 = vmatprep.subr.bf16.mxu0 0
    %298 = vmatpush1.bf16.msra.mxu0 %v274
    %299 = vmatprep.subr.bf16.mxu0 0
    %300 = vmatpush1.bf16.msra.mxu0 0
    %301 = vmatprep.subr.bf16.mxu0 0
    %302 = vmatpush1.bf16.msra.mxu0 0
    %303 = vmatprep.subr.bf16.mxu0 0
    %304 = vmatpush1.bf16.msra.mxu0 0
    %305 = vmatprep.subr.bf16.mxu0 0
    %306 = vmatpush1.bf16.msra.mxu0 0
    %307 = vmatprep.subr.bf16.mxu0 0
    %308 = vmatpush1.bf16.msra.mxu0 0
    %309 = vmatprep.subr.bf16.mxu0 0
    %310 = vmatpush1.bf16.msra.mxu0 0
    %311 = vmatprep.subr.bf16.mxu0 0
    %312 = vmatpush1.bf16.msra.mxu0 0
    %313 = vmatprep.subr.bf16.mxu0 0
    %314 = vmatpush1.bf16.msra.mxu0 0
    %315 = vmatprep.mubr.bf16.mxu0 0
    %316 = vmatmul.mubr.bf16.gmra.mrb[0].mxu0 %v211
    %v317 = vpop.f32.mrb[0].mxu0
    %v318 = vadd.f32 %v233, %v317
    %v319 = vpop.f32.mrb[0].mxu0
    %v320 = vpop.f32.mrb[0].mxu0
    %v321 = vpop.f32.mrb[0].mxu0
    %322 = vdwg.mxu0
    %323 = vst [vmem:[#allocation2] sm:$0xff] %v318
    // Predicated region
    $region30: #{dqn_forward.1} parent=1 // pred_check
      _
    $region31: #{dqn_forward.1} parent=1 // pred_check_branch
      %325 = sbr.rel (0) target = $region33
    $region32: #{dqn_forward.1} parent=1 // pred_region
      %s327 = ssub.s32 128, 64
      %328 = vsyncadd [#allocation3], %s327
      %s329 = sshll.u32 [#allocation2], 4
      %s330 = int_to_ptr.vmem [resolvable:$true] %s329
      %335 = dma.vmem_to_hbm [thread:$0]  %s330, 64, %s7, [#allocation3], 64, 64, 4
    $region33: #{dqn_forward.1} parent=1 // pred_fallthru
      _
    // Predicated region
    $region34: #{dqn_forward.1} parent=1 // pred_check
      _
    $region35: #{dqn_forward.1} parent=1 // pred_check_branch
      %337 = sbr.rel (0) target = $region37
    $region36: #{dqn_forward.1} parent=1 // pred_region
      %338 = dma.done [#allocation3], 128
    $region37: #{dqn_forward.1} parent=1 // pred_fallthru
      _
    %339 = vsyncpa [#allocation3], 1

</llo_original>
